<compile_context>
chip_gen: v6e
topology: v6e:2x2x1
jax: 0.10.0
libtpu: 0.0.40
codegen_flags: <defaults>
</compile_context>

<pallas_src>
import functools

import jax
import jax.numpy as jnp
from jax import lax
from jax.experimental import pallas as pl
from jax.experimental.pallas import tpu as pltpu


def _corr_kernel(a_ref, b_ref, out_ref, *, lhs_contract_dim):
    # a_ref: (tq, c) if lhs_contract_dim == 1 else (c, tq)
    # b_ref: (c, tp)
    # out_ref: (tq, tp) correlation tile, already in final (q, p) order.
    out_ref[...] = lax.dot_general(
        a_ref[...],
        b_ref[...],
        dimension_numbers=(((lhs_contract_dim,), (0,)), ((), ())),
        preferred_element_type=jnp.float32,
    ).astype(out_ref.dtype)


def _round_up(x, m):
    return ((x + m - 1) // m) * m


def _physical_vmem_bytes():
    """Physical VMEM capacity; conservative (v7x per-TC) fallback if unknown."""
    try:
        info = pltpu.get_tpu_info()
        cap = getattr(info, "vmem_capacity_bytes", None)
        if cap:
            return int(cap)
    except Exception:
        pass
    return 64 * 1024 * 1024


def _pick_tiles(hw, c, in_itemsize, out_itemsize, budget_bytes):
    """128-multiple (tq, tp) whose double-buffered footprint fits the budget."""
    hw128 = _round_up(hw, 128)
    tp = min(256, hw128)          # keep MXU N full (v6e/v7x) and lanes dense
    tq = min(2048, hw128)         # big resident tile -> fewer B re-reads

    def footprint(tq_, tp_):
        return (2 * in_itemsize * c * (tq_ + tp_)     # A + B double buffers
                + 2 * out_itemsize * tq_ * tp_)       # output double buffer

    while tq > 128 and footprint(tq, tp) > budget_bytes:
        tq -= 128
    while tp > 128 and footprint(tq, tp) > budget_bytes:
        tp -= 128
    return tq, tp


def correlation_volume(feature_A, feature_B, *, tile_q=None, tile_p=None,
                       out_dtype=None, b_buffer_count=2):
    """feature_A, feature_B: (b, c, h, w) -> correlation tensor (b, h*w, h, w)."""
    assert feature_A.shape == feature_B.shape, (feature_A.shape, feature_B.shape)
    assert feature_A.dtype == feature_B.dtype, (feature_A.dtype, feature_B.dtype)
    b, c, h, w = feature_A.shape
    hw = h * w
    # bf16 here halves the dominant b*hw^2 writeback if the consumer tolerates it.
    out_dtype = out_dtype or feature_A.dtype

    in_itemsize = jnp.dtype(feature_A.dtype).itemsize
    out_itemsize = jnp.dtype(out_dtype).itemsize

    cap = _physical_vmem_bytes()
    budget = int(0.4 * cap)       # headroom for Mosaic internals / semaphores
    auto_tq, auto_tp = _pick_tiles(hw, c, in_itemsize, out_itemsize, budget)
    tq = tile_q or auto_tq
    tp = tile_p or auto_tp

    # p = hB*w + wB (natural flatten of B) -- free reshape, no transpose.
    b_flat = feature_B.reshape(b, c, hw)

    # q = wA*h + hA (w-major flatten of A) -- tiny input relayout in XLA
    # (b*c*h*w elements, negligible next to the b*hw^2 output).
    if c >= 128:
        # Canonical MXU orientation: (q, c) x (c, p); no per-tile XLU transpose.
        a_flat = jnp.transpose(feature_A, (0, 3, 2, 1)).reshape(b, hw, c)
        a_spec = pl.BlockSpec((None, tq, c), lambda bi, qi, pi: (bi, qi, 0))
        lhs_contract_dim = 1
    else:
        # Tiny channel count: keep c on sublanes and q on lanes (no lane padding).
        a_flat = jnp.transpose(feature_A, (0, 1, 3, 2)).reshape(b, c, hw)
        a_spec = pl.BlockSpec((None, c, tq), lambda bi, qi, pi: (bi, 0, qi))
        lhs_contract_dim = 0

    b_spec_kwargs = {}
    if b_buffer_count > 2:
        # Opt-in deeper pipelining on the only per-step streaming input; useful
        # when c is tiny and per-step MXU work cannot hide the B fetch.
        b_spec_kwargs["pipeline_mode"] = pl.Buffered(b_buffer_count)
    b_spec = pl.BlockSpec((None, c, tp), lambda bi, qi, pi: (bi, 0, pi),
                          **b_spec_kwargs)

    nq = pl.cdiv(hw, tq)
    np_ = pl.cdiv(hw, tp)
    grid = (b, nq, np_)

    footprint = 2 * in_itemsize * c * (tq + tp) + 2 * out_itemsize * tq * tp
    vmem_limit = int(min(max(footprint + (8 << 20), 32 << 20), int(0.75 * cap)))

    cost = pl.CostEstimate(
        flops=2 * b * hw * hw * c,
        transcendentals=0,
        bytes_accessed=(out_itemsize * b * hw * hw        # output writeback
                        + in_itemsize * b * c * hw        # A read once
                        + in_itemsize * b * c * hw * nq), # B re-read per q tile
    )

    mul = pl.pallas_call(
        functools.partial(_corr_kernel, lhs_contract_dim=lhs_contract_dim),
        out_shape=jax.ShapeDtypeStruct((b, hw, hw), out_dtype),
        grid_spec=pl.GridSpec(
            grid=grid,
            in_specs=[a_spec, b_spec],
            out_specs=pl.BlockSpec((None, tq, tp), lambda bi, qi, pi: (bi, qi, pi)),
        ),
        compiler_params=pltpu.CompilerParams(
            dimension_semantics=("parallel", "parallel", "parallel"),
            vmem_limit_bytes=vmem_limit,
        ),
        cost_estimate=cost,
    )(a_flat, b_flat)

    # (b, q, p) with p = hB*w + wB  ->  (b, h*w, h, w): free reshape, no transpose.
    return mul.reshape(b, hw, h, w)


def _reference(feature_A, feature_B):
    """Pure-JAX mirror of the PyTorch forward for verification."""
    b, c, h, w = feature_A.shape
    A = jnp.transpose(feature_A, (0, 1, 3, 2)).reshape(b, c, h * w)
    B = jnp.transpose(feature_B.reshape(b, c, h * w), (0, 2, 1))
    mul = jnp.einsum("bpc,bcq->bpq", B, A)
    return jnp.transpose(mul.reshape(b, h, w, h * w), (0, 3, 1, 2))


def _check(b, c, h, w, key, **kwargs):
    kA, kB = jax.random.split(key)
    feature_A = jax.random.normal(kA, (b, c, h, w), dtype=jnp.float32)
    feature_B = jax.random.normal(kB, (b, c, h, w), dtype=jnp.float32)

    fn = jax.jit(functools.partial(correlation_volume, **kwargs))
    out = jax.block_until_ready(fn(feature_A, feature_B))

    ref = _reference(feature_A, feature_B)
    assert out.shape == (b, h * w, h, w), out.shape
    assert jnp.allclose(out, ref, atol=1e-4, rtol=1e-4), \
        f"mismatch vs reference for shape {(b, c, h, w)}"


if __name__ == "__main__":
    key = jax.random.PRNGKey(0)
    k1, k2, k3 = jax.random.split(key, 3)

    # Primary case (small shapes consistent with the module).
    _check(2, 4, 16, 16, k1)
    # Non-divisible hw -> pl.cdiv grid with masked edge tiles (no full-extent fallback).
    _check(1, 4, 16, 24, k2, tile_q=256, tile_p=256)
    # Channel-heavy case exercising the canonical (q, c) x (c, p) MXU orientation.
    _check(1, 128, 16, 16, k3)

    print("KERNEL_OK")
</pallas_src>

<mosaic_0001>
module attributes {stable_mosaic.version = 11 : i64} {
  func.func @_corr_kernel(%arg0: i32, %arg1: i32, %arg2: i32, %arg3: memref<1x4x256xf32, #tpu.memory_space<vmem>>, %arg4: memref<1x4x256xf32, #tpu.memory_space<vmem>>, %arg5: memref<1x256x256xf32, #tpu.memory_space<vmem>>) attributes {dimension_semantics = [#tpu.dimension_semantics<parallel>, #tpu.dimension_semantics<parallel>, #tpu.dimension_semantics<parallel>], iteration_bounds = array<i64: 2, 1, 1>, scalar_prefetch = 0 : i64, scratch_operands = 0 : i64, tpu.core_type = #tpu.core_type<tc>, window_params = [{transform_indices = @transform_0, window_bounds = array<i64: 1, 4, 256>}, {transform_indices = @transform_1, window_bounds = array<i64: 1, 4, 256>}, {transform_indices = @transform_2, window_bounds = array<i64: 1, 256, 256>}]} {
    %c0 = arith.constant 0 : index
    %c0_0 = arith.constant 0 : index
    %c0_1 = arith.constant 0 : index
    %0 = vector.load %arg3[%c0, %c0_0, %c0_1] : memref<1x4x256xf32, #tpu.memory_space<vmem>>, vector<1x4x256xf32>
    %1 = vector.shape_cast %0 : vector<1x4x256xf32> to vector<4x256xf32>
    %c0_2 = arith.constant 0 : index
    %c0_3 = arith.constant 0 : index
    %c0_4 = arith.constant 0 : index
    %2 = vector.load %arg4[%c0_2, %c0_3, %c0_4] : memref<1x4x256xf32, #tpu.memory_space<vmem>>, vector<1x4x256xf32>
    %3 = vector.shape_cast %2 : vector<1x4x256xf32> to vector<4x256xf32>
    %cst = arith.constant dense<0.000000e+00> : vector<256x256xf32>
    %4 = tpu.matmul %1, %3, %cst {dimension_numbers = #tpu.dot_dimension_numbers<[0], [0], [1], [1], [0, 1, 1, 1], [], []>} : vector<4x256xf32>, vector<4x256xf32>, vector<256x256xf32> -> vector<256x256xf32>
    %c0_5 = arith.constant 0 : index
    %c0_6 = arith.constant 0 : index
    %c0_7 = arith.constant 0 : index
    %5 = vector.load %arg5[%c0_5, %c0_6, %c0_7] : memref<1x256x256xf32, #tpu.memory_space<vmem>>, vector<1x256x256xf32>
    %6 = vector.shape_cast %5 : vector<1x256x256xf32> to vector<256x256xf32>
    %7 = vector.shape_cast %4 : vector<256x256xf32> to vector<1x256x256xf32>
    tpu.vector_store %arg5[%c0_5, %c0_6, %c0_7], %7 {strides = array<i32>} : memref<1x256x256xf32, #tpu.memory_space<vmem>>, vector<1x256x256xf32>,
    return
  }
  func.func @transform_0(%arg0: i32, %arg1: i32, %arg2: i32) -> (i32, i32, i32) {
    %c0_i32 = arith.constant 0 : i32
    %c0_i32_0 = arith.constant 0 : i32
    return %arg0, %c0_i32, %arg1 : i32, i32, i32
  }
  func.func @transform_1(%arg0: i32, %arg1: i32, %arg2: i32) -> (i32, i32, i32) {
    %c0_i32 = arith.constant 0 : i32
    %c0_i32_0 = arith.constant 0 : i32
    return %arg0, %c0_i32, %arg2 : i32, i32, i32
  }
  func.func @transform_2(%arg0: i32, %arg1: i32, %arg2: i32) -> (i32, i32, i32) {
    %c0_i32 = arith.constant 0 : i32
    return %arg0, %arg1, %arg2 : i32, i32, i32
  }
}

</mosaic_0001>

<llo_original>
// kernel: correlation_volume.1
$region0: #{correlation_volume.1}
  #allocation0 [shape = 'u32[]', space=smem, size = 0x4, offset = 0x4, fixed_abs, tag = 'smem constant byte address 0x4 - core index']
  #allocation1 [shape = 'u32[144,128]{1,0:T(1,128)}', space=vmem, size = 0x12000, scoped, tag = 'internal scratch']
  %s0 = inlined_call_operand.vmem [shape: f32[2,4,256], index: 0, kind: input, shape index: {}]
  %s1 = inlined_call_operand.vmem [shape: f32[2,4,256], index: 1, kind: input, shape index: {}]
  %s2 = inlined_call_operand.vmem [shape: f32[2,256,256], index: 2, kind: output, shape index: {}]
  %s3 = sld [smem:[#allocation0]]
  $region41: #{correlation_volume.1} parent=0
    _
  %s5 = ssub.s32 1, %s3
  %s6 = scalar_select 0, %s5, %s3
  loop: start=0, step=1, limit=4
  $region2: #{correlation_volume.1} parent=0 // loop_pre_header
    _
  $region3: #{correlation_volume.1} parent=0 // loop_header
    %s8 = sphi 0, %s12
    %p9 = scmp.ge.s32.totalorder %s8, 4
    %s15 = sphi 0, %s34
    %s16 = sphi 0, %s30
    %s17 = sphi 0, %s26
    %s18 = sphi 0, %s15
    %s19 = sphi 0, %s16
    %s20 = sphi 0, %s17
    %s21 = sphi 0, %s18
    %s22 = sphi 0, %s19
    %s23 = sphi 0, %s20
    %s39 = sphi 0, %s41
    %s42 = sphi 0, %s39
    %s43 = sphi 0, %s42
    %s59 = sphi 0, %s43
    %s67 = sphi 0, %s69
    %s70 = sphi 0, %s67
    %s71 = sphi 0, %s70
    %s87 = sphi 0, %s71
    %s97 = sphi 0, %s99
    %s100 = sphi 0, %s97
    %s101 = sphi 0, %s100
    %s117 = sphi 0, %s101
  $region4: #{correlation_volume.1} parent=0 // loop_header_branch
    %11 = sbr.rel (%p9) target = $region8
  $region5: #{correlation_volume.1} parent=0 // loop_body
    %s13 = ssub.s32 %s8, 1
    %s14 = ssub.s32 %s8, 2
    %s24 = sadd.s32 1, %s17
    %p25 = scmp.ge.s32.totalorder %s24, 1
    %s26 = scalar_select %p25, 0, %s24
    %s27 = sadd.s32 1, %s16
    %s28 = scalar_select %p25, %s27, %s16
    %p29 = scmp.ge.s32.totalorder %s28, 1
    %s30 = scalar_select %p29, 0, %s28
    %s31 = sadd.s32 1, %s15
    %s32 = scalar_select %p29, %s31, %s15
    %p33 = scmp.ge.s32.totalorder %s32, 2
    %s34 = scalar_select %p33, 0, %s32
    %s35 = ssub.s32 %s15, %s34
    %s36 = ssub.s32 %s16, %s30
    %s37 = sor.u32 %s35, %s36
    %p38 = scmp.eq.s32.totalorder %s37, 0
    %s40 = sadd.s32 %s39, 1
    %s41 = scalar_select %p38, %s39, %s40
    %p44 = pneg %p38
    %p45 = scmp.eq.s32.totalorder %s8, 1
    %p46 = por %p44, %p45
    %p47 = scmp.ne.s32.totalorder %s39, %s42
    %p48 = scmp.eq.s32.totalorder %s8, 0
    %p49 = por %p47, %p48
    %p50 = scmp.ne.s32.totalorder %s39, %s42
    %p51 = scmp.eq.s32.totalorder %s13, 1
    %p52 = por %p50, %p51
    %p53 = scmp.ne.s32.totalorder %s42, %s43
    %p54 = scmp.eq.s32.totalorder %s13, 0
    %p55 = por %p53, %p54
    %p56 = scmp.ne.s32.totalorder %s42, %s43
    %p57 = scmp.eq.s32.totalorder %s14, 1
    %p58 = por %p56, %p57
    %p60 = scmp.ne.s32.totalorder %s43, %s59
    %p61 = scmp.eq.s32.totalorder %s14, 0
    %p62 = por %p60, %p61
    %s63 = ssub.s32 %s15, %s34
    %s64 = ssub.s32 %s17, %s26
    %s65 = sor.u32 %s63, %s64
    %p66 = scmp.eq.s32.totalorder %s65, 0
    %s68 = sadd.s32 %s67, 1
    %s69 = scalar_select %p66, %s67, %s68
    %p72 = pneg %p66
    %p73 = scmp.eq.s32.totalorder %s8, 1
    %p74 = por %p72, %p73
    %p75 = scmp.ne.s32.totalorder %s67, %s70
    %p76 = scmp.eq.s32.totalorder %s8, 0
    %p77 = por %p75, %p76
    %p78 = scmp.ne.s32.totalorder %s67, %s70
    %p79 = scmp.eq.s32.totalorder %s13, 1
    %p80 = por %p78, %p79
    %p81 = scmp.ne.s32.totalorder %s70, %s71
    %p82 = scmp.eq.s32.totalorder %s13, 0
    %p83 = por %p81, %p82
    %p84 = scmp.ne.s32.totalorder %s70, %s71
    %p85 = scmp.eq.s32.totalorder %s14, 1
    %p86 = por %p84, %p85
    %p88 = scmp.ne.s32.totalorder %s71, %s87
    %p89 = scmp.eq.s32.totalorder %s14, 0
    %p90 = por %p88, %p89
    %s91 = ssub.s32 %s15, %s34
    %s92 = ssub.s32 %s16, %s30
    %s93 = sor.u32 %s91, %s92
    %s94 = ssub.s32 %s17, %s26
    %s95 = sor.u32 %s93, %s94
    %p96 = scmp.eq.s32.totalorder %s95, 0
    %s98 = sadd.s32 %s97, 1
    %s99 = scalar_select %p96, %s97, %s98
    %p102 = pneg %p96
    %p103 = scmp.eq.s32.totalorder %s8, 1
    %p104 = por %p102, %p103
    %p105 = scmp.ne.s32.totalorder %s97, %s100
    %p106 = scmp.eq.s32.totalorder %s8, 0
    %p107 = por %p105, %p106
    %p108 = scmp.ne.s32.totalorder %s97, %s100
    %p109 = scmp.eq.s32.totalorder %s13, 1
    %p110 = por %p108, %p109
    %p111 = scmp.ne.s32.totalorder %s100, %s101
    %p112 = scmp.eq.s32.totalorder %s13, 0
    %p113 = por %p111, %p112
    %p114 = scmp.ne.s32.totalorder %s100, %s101
    %p115 = scmp.eq.s32.totalorder %s14, 1
    %p116 = por %p114, %p115
    %p118 = scmp.ne.s32.totalorder %s101, %s117
    %p119 = scmp.eq.s32.totalorder %s14, 0
    %p120 = por %p118, %p119
    %p121 = scmp.le.s32.totalorder 1, %s8
    %p122 = scmp.lt.s32.totalorder %s8, 3
    %p123 = pnand %p121, %p122
    %p124 = pneg %p123
    // Predicated region
    $region9: #{correlation_volume.1} parent=5 // pred_check
      _
    $region10: #{correlation_volume.1} parent=5 // pred_check_branch
      %126 = sbr.rel (%p123) target = $region12
    $region11: #{correlation_volume.1} parent=5 // pred_region
      %s127 = ssub.s32 %s8, 1
    $region12: #{correlation_volume.1} parent=5 // pred_fallthru
      _
    %p128 = scmp.lt.s32.totalorder %s8, 2
    // Predicated region
    $region13: #{correlation_volume.1} parent=5 // pred_check
      %p129 = pneg %p128
    $region14: #{correlation_volume.1} parent=5 // pred_check_branch
      %131 = sbr.rel (%p129) target = $region16
    $region15: #{correlation_volume.1} parent=5 // pred_region
      // Predicated region
      $region17: #{correlation_volume.1} parent=15 // pred_check
        %p132 = pneg %p49
      $region18: #{correlation_volume.1} parent=15 // pred_check_branch
        %134 = sbr.rel (%p132) target = $region20
      $region19: #{correlation_volume.1} parent=15 // pred_region
        %s135 = smul.u32 2, %s16
        %p136 = scmp.lt.s32.totalorder %s15, 1
        %s137 = scalar_select %p136, %s15, 1
        %p138 = scmp.lt.s32.totalorder %s135, 1
        %s139 = scalar_select %p138, %s135, 1
        %s140 = smul.addr %s137, 2
        %s141 = sadd.s32 %s139, %s140
        %s142 = smul.addr %s141, 4
        %s143 = scalar_lea.vmem %s0, %s142
        %s144 = smul.u32 2, %s16
      $region20: #{correlation_volume.1} parent=15 // pred_fallthru
        _
      // Predicated region
      $region21: #{correlation_volume.1} parent=15 // pred_check
        %p145 = pneg %p77
      $region22: #{correlation_volume.1} parent=15 // pred_check_branch
        %147 = sbr.rel (%p145) target = $region24
      $region23: #{correlation_volume.1} parent=15 // pred_region
        %s148 = smul.u32 2, %s17
        %p149 = scmp.lt.s32.totalorder %s15, 1
        %s150 = scalar_select %p149, %s15, 1
        %p151 = scmp.lt.s32.totalorder %s148, 1
        %s152 = scalar_select %p151, %s148, 1
        %s153 = smul.addr %s150, 2
        %s154 = sadd.s32 %s152, %s153
        %s155 = smul.addr %s154, 4
        %s156 = scalar_lea.vmem %s1, %s155
        %s157 = smul.u32 2, %s17
      $region24: #{correlation_volume.1} parent=15 // pred_fallthru
        _
    $region16: #{correlation_volume.1} parent=5 // pred_fallthru
      _
    %p158 = scmp.le.s32.totalorder 1, %s8
    %p159 = scmp.lt.s32.totalorder %s8, 3
    %p160 = pnand %p158, %p159
    %p161 = pneg %p160
    // Predicated region
    $region25: #{correlation_volume.1} parent=5 // pred_check
      _
    $region26: #{correlation_volume.1} parent=5 // pred_check_branch
      %163 = sbr.rel (%p160) target = $region28
    $region27: #{correlation_volume.1} parent=5 // pred_region
      %s164 = ssub.s32 %s8, 1
      %s165 = smul.u32 2, %s19
      %p166 = scmp.lt.s32.totalorder %s18, 1
      %s167 = scalar_select %p166, %s18, 1
      %p168 = scmp.lt.s32.totalorder %s165, 1
      %s169 = scalar_select %p168, %s165, 1
      %s170 = smul.addr %s167, 2
      %s171 = sadd.s32 %s169, %s170
      %s172 = smul.addr %s171, 4
      %s173 = scalar_lea.vmem %s0, %s172
      %p174 = pneg %p55
      %p175 = pneg %p52
      %s176 = smul.u32 2, %s20
      %p177 = scmp.lt.s32.totalorder %s18, 1
      %s178 = scalar_select %p177, %s18, 1
      %p179 = scmp.lt.s32.totalorder %s176, 1
      %s180 = scalar_select %p179, %s176, 1
      %s181 = smul.addr %s178, 2
      %s182 = sadd.s32 %s180, %s181
      %s183 = smul.addr %s182, 4
      %s184 = scalar_lea.vmem %s1, %s183
      %p185 = pneg %p83
      %p186 = pneg %p80
      %p187 = pneg %p113
      %p188 = pneg %p110
      %s189 = smul.u32 32, %s19
      %s190 = smul.u32 2, %s20
      %p191 = scmp.lt.s32.totalorder %s18, 1
      %s192 = scalar_select %p191, %s18, 1
      %p193 = scmp.lt.s32.totalorder %s189, 31
      %s194 = scalar_select %p193, %s189, 31
      %p195 = scmp.lt.s32.totalorder %s190, 1
      %s196 = scalar_select %p195, %s190, 1
      %s197 = smul.addr %s194, 2
      %s198 = sadd.s32 %s196, %s197
      %s199 = smul.addr %s192, 64
      %s200 = sadd.s32 %s198, %s199
      %s201 = smul.addr %s200, 8
      %s202 = scalar_lea.vmem %s2, %s201
      %s203 = smul.u32 2, %s19
      %p204 = scmp.lt.s32.totalorder %s18, 1
      %s205 = scalar_select %p204, %s18, 1
      %p206 = scmp.lt.s32.totalorder %s203, 1
      %s207 = scalar_select %p206, %s203, 1
      %s208 = smul.addr %s205, 2
      %s209 = sadd.s32 %s207, %s208
      %s210 = smul.addr %s209, 4
      %s211 = scalar_lea.vmem %s0, %s210
      %s212 = smul.u32 2, %s19
      %s213 = smul.u32 2, %s20
      %p214 = scmp.lt.s32.totalorder %s18, 1
      %s215 = scalar_select %p214, %s18, 1
      %p216 = scmp.lt.s32.totalorder %s213, 1
      %s217 = scalar_select %p216, %s213, 1
      %s218 = smul.addr %s215, 2
      %s219 = sadd.s32 %s217, %s218
      %s220 = smul.addr %s219, 4
      %s221 = scalar_lea.vmem %s1, %s220
      %s222 = smul.u32 2, %s20
      %s223 = smul.u32 32, %s19
      %s224 = smul.u32 2, %s20
      %p225 = scmp.lt.s32.totalorder %s18, 1
      %s226 = scalar_select %p225, %s18, 1
      %p227 = scmp.lt.s32.totalorder %s223, 31
      %s228 = scalar_select %p227, %s223, 31
      %p229 = scmp.lt.s32.totalorder %s224, 1
      %s230 = scalar_select %p229, %s224, 1
      %s231 = smul.addr %s228, 2
      %s232 = sadd.s32 %s230, %s231
      %s233 = smul.addr %s226, 64
      %s234 = sadd.s32 %s232, %s233
      %s235 = smul.addr %s234, 8
      %s236 = scalar_lea.vmem %s2, %s235
      %s237 = smul.u32 32, %s19
      %s238 = smul.u32 2, %s20
      %v239 = vld [vmem:[%s211] sm:$0xff]
      %v240 = vld [vmem:[%s221] sm:$0xff]
      %v242 = vcombine.high %v239, %v239
      %244 = vxpose.xlu0.b32.start [1/16] %v239, 128
      %245 = vxpose.xlu0.b32.cont [2/16] 0.0, 128
      %246 = vxpose.xlu0.b32.cont [3/16] 0.0, 128
      %247 = vxpose.xlu0.b32.cont [4/16] 0.0, 128
      %248 = vxpose.xlu0.b32.cont [5/16] 0.0, 128
      %249 = vxpose.xlu0.b32.cont [6/16] 0.0, 128
      %250 = vxpose.xlu0.b32.cont [7/16] 0.0, 128
      %251 = vxpose.xlu0.b32.cont [8/16] 0.0, 128
      %252 = vxpose.xlu0.b32.cont [9/16] 0.0, 128
      %253 = vxpose.xlu0.b32.cont [10/16] 0.0, 128
      %254 = vxpose.xlu0.b32.cont [11/16] 0.0, 128
      %255 = vxpose.xlu0.b32.cont [12/16] 0.0, 128
      %256 = vxpose.xlu0.b32.cont [13/16] 0.0, 128
      %257 = vxpose.xlu0.b32.cont [14/16] 0.0, 128
      %258 = vxpose.xlu0.b32.cont [15/16] 0.0, 128
      %259 = vxpose.xlu0.b32.end [16/16] 0.0, 128
      %v260 = vpop.trf.xlu0
      %v261 = vpop.trf.xlu0
      %v262 = vpop.trf.xlu0
      %v263 = vpop.trf.xlu0
      %v264 = vpop.trf.xlu0
      %v265 = vpop.trf.xlu0
      %v266 = vpop.trf.xlu0
      %v267 = vpop.trf.xlu0
      %v268 = vpop.trf.xlu0
      %v269 = vpop.trf.xlu0
      %v270 = vpop.trf.xlu0
      %v271 = vpop.trf.xlu0
      %v272 = vpop.trf.xlu0
      %v273 = vpop.trf.xlu0
      %v274 = vpop.trf.xlu0
      %v275 = vpop.trf.xlu0
      %276 = vxpose.xlu0.b32.start [1/16] %v242, 128
      %277 = vxpose.xlu0.b32.cont [2/16] 0.0, 128
      %278 = vxpose.xlu0.b32.cont [3/16] 0.0, 128
      %279 = vxpose.xlu0.b32.cont [4/16] 0.0, 128
      %280 = vxpose.xlu0.b32.cont [5/16] 0.0, 128
      %281 = vxpose.xlu0.b32.cont [6/16] 0.0, 128
      %282 = vxpose.xlu0.b32.cont [7/16] 0.0, 128
      %283 = vxpose.xlu0.b32.cont [8/16] 0.0, 128
      %284 = vxpose.xlu0.b32.cont [9/16] 0.0, 128
      %285 = vxpose.xlu0.b32.cont [10/16] 0.0, 128
      %286 = vxpose.xlu0.b32.cont [11/16] 0.0, 128
      %287 = vxpose.xlu0.b32.cont [12/16] 0.0, 128
      %288 = vxpose.xlu0.b32.cont [13/16] 0.0, 128
      %289 = vxpose.xlu0.b32.cont [14/16] 0.0, 128
      %290 = vxpose.xlu0.b32.cont [15/16] 0.0, 128
      %291 = vxpose.xlu0.b32.end [16/16] 0.0, 128
      %v292 = vpop.trf.xlu0
      %v293 = vpop.trf.xlu0
      %v294 = vpop.trf.xlu0
      %v295 = vpop.trf.xlu0
      %v296 = vpop.trf.xlu0
      %v297 = vpop.trf.xlu0
      %v298 = vpop.trf.xlu0
      %v299 = vpop.trf.xlu0
      %v300 = vpop.trf.xlu0
      %v301 = vpop.trf.xlu0
      %v302 = vpop.trf.xlu0
      %v303 = vpop.trf.xlu0
      %v304 = vpop.trf.xlu0
      %v305 = vpop.trf.xlu0
      %v306 = vpop.trf.xlu0
      %v307 = vpop.trf.xlu0
      %v309 = vcombine.high %v240, %v240
      %vm310 = vcmask 31744
      %v312 = vsel %vm310, %v260, 0
      %v315 = vsel %vm310, %v261, 0
      %v318 = vsel %vm310, %v262, 0
      %v321 = vsel %vm310, %v263, 0
      %v324 = vsel %vm310, %v264, 0
      %v327 = vsel %vm310, %v265, 0
      %v330 = vsel %vm310, %v266, 0
      %v333 = vsel %vm310, %v267, 0
      %v336 = vsel %vm310, %v268, 0
      %v339 = vsel %vm310, %v269, 0
      %v342 = vsel %vm310, %v270, 0
      %v345 = vsel %vm310, %v271, 0
      %v348 = vsel %vm310, %v272, 0
      %v351 = vsel %vm310, %v273, 0
      %v354 = vsel %vm310, %v274, 0
      %v357 = vsel %vm310, %v275, 0
      %v360 = vsel %vm310, %v292, 0
      %v363 = vsel %vm310, %v293, 0
      %v366 = vsel %vm310, %v294, 0
      %v369 = vsel %vm310, %v295, 0
      %v372 = vsel %vm310, %v296, 0
      %v375 = vsel %vm310, %v297, 0
      %v378 = vsel %vm310, %v298, 0
      %v381 = vsel %vm310, %v299, 0
      %v384 = vsel %vm310, %v300, 0
      %v387 = vsel %vm310, %v301, 0
      %v390 = vsel %vm310, %v302, 0
      %v393 = vsel %vm310, %v303, 0
      %v396 = vsel %vm310, %v304, 0
      %v399 = vsel %vm310, %v305, 0
      %v402 = vsel %vm310, %v306, 0
      %v405 = vsel %vm310, %v307, 0
      %vm407 = vcmask 1043456
      %v408 = vsel %vm407, %v240, 0
      %v410 = vsel %vm407, %v309, 0
      %412 = vmatprep.subr.mxu0 0.0
      %413 = vmatpush1.msra.mxu0 0.0
      %414 = vmatprep.subr.mxu0 0.0
      %415 = vmatpush1.msra.mxu0 0.0
      %416 = vmatprep.subr.mxu0 0.0
      %417 = vmatpush1.msra.mxu0 0.0
      %418 = vmatprep.subr.mxu0 0.0
      %419 = vmatpush1.msra.mxu0 0.0
      %420 = vmatprep.subr.mxu0 0.0
      %421 = vmatpush1.msra.mxu0 0.0
      %422 = vmatprep.subr.mxu0 0.0
      %423 = vmatpush1.msra.mxu0 0.0
      %424 = vmatprep.subr.mxu0 0.0
      %425 = vmatpush1.msra.mxu0 0.0
      %426 = vmatprep.subr.mxu0 0.0
      %427 = vmatpush1.msra.mxu0 0.0
      %428 = vmatprep.subr.mxu0 0.0
      %429 = vmatpush1.msra.mxu0 0.0
      %430 = vmatprep.subr.mxu0 0.0
      %431 = vmatpush1.msra.mxu0 0.0
      %432 = vmatprep.subr.mxu0 0.0
      %433 = vmatpush1.msra.mxu0 0.0
      %434 = vmatprep.subr.mxu0 0.0
      %435 = vmatpush1.msra.mxu0 0.0
      %436 = vmatprep.subr.mxu0 0.0
      %437 = vmatpush1.msra.mxu0 0.0
      %438 = vmatprep.subr.mxu0 0.0
      %439 = vmatpush1.msra.mxu0 0.0
      %440 = vmatprep.subr.mxu0 0.0
      %441 = vmatpush1.msra.mxu0 0.0
      %442 = vmatprep.subr.mxu0 %v410
      %443 = vmatpush1.msra.mxu0 %v408
      %444 = vmatprep.subr.mxu0 0.0
      %445 = vmatpush2.msra.mxu0 0.0
      %446 = vmatprep.subr.mxu0 0.0
      %447 = vmatpush2.msra.mxu0 0.0
      %448 = vmatprep.subr.mxu0 0.0
      %449 = vmatpush2.msra.mxu0 0.0
      %450 = vmatprep.subr.mxu0 0.0
      %451 = vmatpush2.msra.mxu0 0.0
      %452 = vmatprep.subr.mxu0 0.0
      %453 = vmatpush2.msra.mxu0 0.0
      %454 = vmatprep.subr.mxu0 0.0
      %455 = vmatpush2.msra.mxu0 0.0
      %456 = vmatprep.subr.mxu0 0.0
      %457 = vmatpush2.msra.mxu0 0.0
      %458 = vmatprep.subr.mxu0 0.0
      %459 = vmatpush2.msra.mxu0 0.0
      %460 = vmatprep.subr.mxu0 0.0
      %461 = vmatpush2.msra.mxu0 0.0
      %462 = vmatprep.subr.mxu0 0.0
      %463 = vmatpush2.msra.mxu0 0.0
      %464 = vmatprep.subr.mxu0 0.0
      %465 = vmatpush2.msra.mxu0 0.0
      %466 = vmatprep.subr.mxu0 0.0
      %467 = vmatpush2.msra.mxu0 0.0
      %468 = vmatprep.subr.mxu0 0.0
      %469 = vmatpush2.msra.mxu0 0.0
      %470 = vmatprep.subr.mxu0 0.0
      %471 = vmatpush2.msra.mxu0 0.0
      %472 = vmatprep.subr.mxu0 0.0
      %473 = vmatpush2.msra.mxu0 0.0
      %474 = vmatprep.subr.mxu0 0.0
      %475 = vmatpush2.msra.mxu0 0.0
      %476 = vmatprep.mubr.f32.mxu0 0.0
      %477 = vmatmul.mubr.f32.gmra.mxu0 %v312
      %v478 = vpop.f32.mrf.mxu0
      %v479 = vadd.f32 0.0, %v478
      %v480 = vpop.f32.mrf.mxu0
      %v481 = vadd.f32 0.0, %v480
      %482 = vmatprep.mubr.f32.mxu0 0.0
      %483 = vmatmul.mubr.f32.gmra.mxu0 %v315
      %v484 = vpop.f32.mrf.mxu0
      %v485 = vadd.f32 0.0, %v484
      %v486 = vpop.f32.mrf.mxu0
      %v487 = vadd.f32 0.0, %v486
      %488 = vmatprep.mubr.f32.mxu0 0.0
      %489 = vmatmul.mubr.f32.gmra.mxu0 %v318
      %v490 = vpop.f32.mrf.mxu0
      %v491 = vadd.f32 0.0, %v490
      %v492 = vpop.f32.mrf.mxu0
      %v493 = vadd.f32 0.0, %v492
      %494 = vmatprep.mubr.f32.mxu0 0.0
      %495 = vmatmul.mubr.f32.gmra.mxu0 %v321
      %v496 = vpop.f32.mrf.mxu0
      %v497 = vadd.f32 0.0, %v496
      %v498 = vpop.f32.mrf.mxu0
      %v499 = vadd.f32 0.0, %v498
      %500 = vmatprep.mubr.f32.mxu0 0.0
      %501 = vmatmul.mubr.f32.gmra.mxu0 %v324
      %v502 = vpop.f32.mrf.mxu0
      %v503 = vadd.f32 0.0, %v502
      %v504 = vpop.f32.mrf.mxu0
      %v505 = vadd.f32 0.0, %v504
      %506 = vmatprep.mubr.f32.mxu0 0.0
      %507 = vmatmul.mubr.f32.gmra.mxu0 %v327
      %v508 = vpop.f32.mrf.mxu0
      %v509 = vadd.f32 0.0, %v508
      %v510 = vpop.f32.mrf.mxu0
      %v511 = vadd.f32 0.0, %v510
      %512 = vmatprep.mubr.f32.mxu0 0.0
      %513 = vmatmul.mubr.f32.gmra.mxu0 %v330
      %v514 = vpop.f32.mrf.mxu0
      %v515 = vadd.f32 0.0, %v514
      %v516 = vpop.f32.mrf.mxu0
      %v517 = vadd.f32 0.0, %v516
      %518 = vmatprep.mubr.f32.mxu0 0.0
      %519 = vmatmul.mubr.f32.gmra.mxu0 %v333
      %v520 = vpop.f32.mrf.mxu0
      %v521 = vadd.f32 0.0, %v520
      %v522 = vpop.f32.mrf.mxu0
      %v523 = vadd.f32 0.0, %v522
      %524 = vmatprep.mubr.f32.mxu0 0.0
      %525 = vmatmul.mubr.f32.gmra.mxu0 %v336
      %v526 = vpop.f32.mrf.mxu0
      %v527 = vadd.f32 0.0, %v526
      %v528 = vpop.f32.mrf.mxu0
      %v529 = vadd.f32 0.0, %v528
      %530 = vmatprep.mubr.f32.mxu0 0.0
      %531 = vmatmul.mubr.f32.gmra.mxu0 %v339
      %v532 = vpop.f32.mrf.mxu0
      %v533 = vadd.f32 0.0, %v532
      %v534 = vpop.f32.mrf.mxu0
      %v535 = vadd.f32 0.0, %v534
      %536 = vmatprep.mubr.f32.mxu0 0.0
      %537 = vmatmul.mubr.f32.gmra.mxu0 %v342
      %v538 = vpop.f32.mrf.mxu0
      %v539 = vadd.f32 0.0, %v538
      %v540 = vpop.f32.mrf.mxu0
      %v541 = vadd.f32 0.0, %v540
      %542 = vmatprep.mubr.f32.mxu0 0.0
      %543 = vmatmul.mubr.f32.gmra.mxu0 %v345
      %v544 = vpop.f32.mrf.mxu0
      %v545 = vadd.f32 0.0, %v544
      %v546 = vpop.f32.mrf.mxu0
      %v547 = vadd.f32 0.0, %v546
      %548 = vmatprep.mubr.f32.mxu0 0.0
      %549 = vmatmul.mubr.f32.gmra.mxu0 %v348
      %v550 = vpop.f32.mrf.mxu0
      %v551 = vadd.f32 0.0, %v550
      %v552 = vpop.f32.mrf.mxu0
      %v553 = vadd.f32 0.0, %v552
      %554 = vmatprep.mubr.f32.mxu0 0.0
      %555 = vmatmul.mubr.f32.gmra.mxu0 %v351
      %v556 = vpop.f32.mrf.mxu0
      %v557 = vadd.f32 0.0, %v556
      %v558 = vpop.f32.mrf.mxu0
      %v559 = vadd.f32 0.0, %v558
      %560 = vmatprep.mubr.f32.mxu0 0.0
      %561 = vmatmul.mubr.f32.gmra.mxu0 %v354
      %v562 = vpop.f32.mrf.mxu0
      %v563 = vadd.f32 0.0, %v562
      %v564 = vpop.f32.mrf.mxu0
      %v565 = vadd.f32 0.0, %v564
      %566 = vmatprep.mubr.f32.mxu0 0.0
      %567 = vmatmul.mubr.f32.gmra.mxu0 %v357
      %v568 = vpop.f32.mrf.mxu0
      %v569 = vadd.f32 0.0, %v568
      %v570 = vpop.f32.mrf.mxu0
      %v571 = vadd.f32 0.0, %v570
      %572 = vmatprep.mubr.f32.mxu0 0.0
      %573 = vmatmul.mubr.f32.gmra.mxu0 %v360
      %v574 = vpop.f32.mrf.mxu0
      %v575 = vadd.f32 0.0, %v574
      %v576 = vpop.f32.mrf.mxu0
      %v577 = vadd.f32 0.0, %v576
      %578 = vmatprep.mubr.f32.mxu0 0.0
      %579 = vmatmul.mubr.f32.gmra.mxu0 %v363
      %v580 = vpop.f32.mrf.mxu0
      %v581 = vadd.f32 0.0, %v580
      %v582 = vpop.f32.mrf.mxu0
      %v583 = vadd.f32 0.0, %v582
      %584 = vmatprep.mubr.f32.mxu0 0.0
      %585 = vmatmul.mubr.f32.gmra.mxu0 %v366
      %v586 = vpop.f32.mrf.mxu0
      %v587 = vadd.f32 0.0, %v586
      %v588 = vpop.f32.mrf.mxu0
      %v589 = vadd.f32 0.0, %v588
      %590 = vmatprep.mubr.f32.mxu0 0.0
      %591 = vmatmul.mubr.f32.gmra.mxu0 %v369
      %v592 = vpop.f32.mrf.mxu0
      %v593 = vadd.f32 0.0, %v592
      %v594 = vpop.f32.mrf.mxu0
      %v595 = vadd.f32 0.0, %v594
      %596 = vmatprep.mubr.f32.mxu0 0.0
      %597 = vmatmul.mubr.f32.gmra.mxu0 %v372
      %v598 = vpop.f32.mrf.mxu0
      %v599 = vadd.f32 0.0, %v598
      %v600 = vpop.f32.mrf.mxu0
      %v601 = vadd.f32 0.0, %v600
      %602 = vmatprep.mubr.f32.mxu0 0.0
      %603 = vmatmul.mubr.f32.gmra.mxu0 %v375
      %v604 = vpop.f32.mrf.mxu0
      %v605 = vadd.f32 0.0, %v604
      %v606 = vpop.f32.mrf.mxu0
      %v607 = vadd.f32 0.0, %v606
      %608 = vmatprep.mubr.f32.mxu0 0.0
      %609 = vmatmul.mubr.f32.gmra.mxu0 %v378
      %v610 = vpop.f32.mrf.mxu0
      %v611 = vadd.f32 0.0, %v610
      %v612 = vpop.f32.mrf.mxu0
      %v613 = vadd.f32 0.0, %v612
      %614 = vmatprep.mubr.f32.mxu0 0.0
      %615 = vmatmul.mubr.f32.gmra.mxu0 %v381
      %v616 = vpop.f32.mrf.mxu0
      %v617 = vadd.f32 0.0, %v616
      %v618 = vpop.f32.mrf.mxu0
      %v619 = vadd.f32 0.0, %v618
      %620 = vmatprep.mubr.f32.mxu0 0.0
      %621 = vmatmul.mubr.f32.gmra.mxu0 %v384
      %v622 = vpop.f32.mrf.mxu0
      %v623 = vadd.f32 0.0, %v622
      %v624 = vpop.f32.mrf.mxu0
      %v625 = vadd.f32 0.0, %v624
      %626 = vmatprep.mubr.f32.mxu0 0.0
      %627 = vmatmul.mubr.f32.gmra.mxu0 %v387
      %v628 = vpop.f32.mrf.mxu0
      %v629 = vadd.f32 0.0, %v628
      %v630 = vpop.f32.mrf.mxu0
      %v631 = vadd.f32 0.0, %v630
      %632 = vmatprep.mubr.f32.mxu0 0.0
      %633 = vmatmul.mubr.f32.gmra.mxu0 %v390
      %v634 = vpop.f32.mrf.mxu0
      %v635 = vadd.f32 0.0, %v634
      %v636 = vpop.f32.mrf.mxu0
      %v637 = vadd.f32 0.0, %v636
      %638 = vmatprep.mubr.f32.mxu0 0.0
      %639 = vmatmul.mubr.f32.gmra.mxu0 %v393
      %v640 = vpop.f32.mrf.mxu0
      %v641 = vadd.f32 0.0, %v640
      %v642 = vpop.f32.mrf.mxu0
      %v643 = vadd.f32 0.0, %v642
      %644 = vmatprep.mubr.f32.mxu0 0.0
      %645 = vmatmul.mubr.f32.gmra.mxu0 %v396
      %v646 = vpop.f32.mrf.mxu0
      %v647 = vadd.f32 0.0, %v646
      %v648 = vpop.f32.mrf.mxu0
      %v649 = vadd.f32 0.0, %v648
      %650 = vmatprep.mubr.f32.mxu0 0.0
      %651 = vmatmul.mubr.f32.gmra.mxu0 %v399
      %v652 = vpop.f32.mrf.mxu0
      %v653 = vadd.f32 0.0, %v652
      %v654 = vpop.f32.mrf.mxu0
      %v655 = vadd.f32 0.0, %v654
      %656 = vmatprep.mubr.f32.mxu0 0.0
      %657 = vmatmul.mubr.f32.gmra.mxu0 %v402
      %v658 = vpop.f32.mrf.mxu0
      %v659 = vadd.f32 0.0, %v658
      %v660 = vpop.f32.mrf.mxu0
      %v661 = vadd.f32 0.0, %v660
      %662 = vmatprep.mubr.f32.mxu0 0.0
      %663 = vmatmul.mubr.f32.gmra.mxu0 %v405
      %v664 = vpop.f32.mrf.mxu0
      %v665 = vadd.f32 0.0, %v664
      %v666 = vpop.f32.mrf.mxu0
      %v667 = vadd.f32 0.0, %v666
      %668 = vdwg.mxu0
      %669 = vst [vmem:[%s236] sm:$0xff] %v479
      %670 = vst [vmem:[%s236 + $0x8] sm:$0xff] %v481
      %671 = vst [vmem:[%s236 + $0x10] sm:$0xff] %v485
      %672 = vst [vmem:[%s236 + $0x18] sm:$0xff] %v487
      %673 = vst [vmem:[%s236 + $0x20] sm:$0xff] %v491
      %674 = vst [vmem:[%s236 + $0x28] sm:$0xff] %v493
      %675 = vst [vmem:[%s236 + $0x30] sm:$0xff] %v497
      %676 = vst [vmem:[%s236 + $0x38] sm:$0xff] %v499
      %677 = vst [vmem:[%s236 + $0x40] sm:$0xff] %v503
      %678 = vst [vmem:[%s236 + $0x48] sm:$0xff] %v505
      %679 = vst [vmem:[%s236 + $0x50] sm:$0xff] %v509
      %680 = vst [vmem:[%s236 + $0x58] sm:$0xff] %v511
      %681 = vst [vmem:[%s236 + $0x60] sm:$0xff] %v515
      %682 = vst [vmem:[%s236 + $0x68] sm:$0xff] %v517
      %683 = vst [vmem:[%s236 + $0x70] sm:$0xff] %v521
      %684 = vst [vmem:[%s236 + $0x78] sm:$0xff] %v523
      %685 = vst [vmem:[%s236 + $0x80] sm:$0xff] %v527
      %686 = vst [vmem:[%s236 + $0x88] sm:$0xff] %v529
      %687 = vst [vmem:[%s236 + $0x90] sm:$0xff] %v533
      %688 = vst [vmem:[%s236 + $0x98] sm:$0xff] %v535
      %689 = vst [vmem:[%s236 + $0xa0] sm:$0xff] %v539
      %690 = vst [vmem:[%s236 + $0xa8] sm:$0xff] %v541
      %691 = vst [vmem:[%s236 + $0xb0] sm:$0xff] %v545
      %692 = vst [vmem:[%s236 + $0xb8] sm:$0xff] %v547
      %693 = vst [vmem:[%s236 + $0xc0] sm:$0xff] %v551
      %694 = vst [vmem:[%s236 + $0xc8] sm:$0xff] %v553
      %695 = vst [vmem:[%s236 + $0xd0] sm:$0xff] %v557
      %696 = vst [vmem:[%s236 + $0xd8] sm:$0xff] %v559
      %697 = vst [vmem:[%s236 + $0xe0] sm:$0xff] %v563
      %698 = vst [vmem:[%s236 + $0xe8] sm:$0xff] %v565
      %699 = vst [vmem:[%s236 + $0xf0] sm:$0xff] %v569
      %700 = vst [vmem:[%s236 + $0xf8] sm:$0xff] %v571
      %701 = vst [vmem:[%s236 + $0x100] sm:$0xff] %v575
      %702 = vst [vmem:[%s236 + $0x108] sm:$0xff] %v577
      %703 = vst [vmem:[%s236 + $0x110] sm:$0xff] %v581
      %704 = vst [vmem:[%s236 + $0x118] sm:$0xff] %v583
      %705 = vst [vmem:[%s236 + $0x120] sm:$0xff] %v587
      %706 = vst [vmem:[%s236 + $0x128] sm:$0xff] %v589
      %707 = vst [vmem:[%s236 + $0x130] sm:$0xff] %v593
      %708 = vst [vmem:[%s236 + $0x138] sm:$0xff] %v595
      %709 = vst [vmem:[%s236 + $0x140] sm:$0xff] %v599
      %710 = vst [vmem:[%s236 + $0x148] sm:$0xff] %v601
      %711 = vst [vmem:[%s236 + $0x150] sm:$0xff] %v605
      %712 = vst [vmem:[%s236 + $0x158] sm:$0xff] %v607
      %713 = vst [vmem:[%s236 + $0x160] sm:$0xff] %v611
      %714 = vst [vmem:[%s236 + $0x168] sm:$0xff] %v613
      %715 = vst [vmem:[%s236 + $0x170] sm:$0xff] %v617
      %716 = vst [vmem:[%s236 + $0x178] sm:$0xff] %v619
      %717 = vst [vmem:[%s236 + $0x180] sm:$0xff] %v623
      %718 = vst [vmem:[%s236 + $0x188] sm:$0xff] %v625
      %719 = vst [vmem:[%s236 + $0x190] sm:$0xff] %v629
      %720 = vst [vmem:[%s236 + $0x198] sm:$0xff] %v631
      %721 = vst [vmem:[%s236 + $0x1a0] sm:$0xff] %v635
      %722 = vst [vmem:[%s236 + $0x1a8] sm:$0xff] %v637
      %723 = vst [vmem:[%s236 + $0x1b0] sm:$0xff] %v641
      %724 = vst [vmem:[%s236 + $0x1b8] sm:$0xff] %v643
      %725 = vst [vmem:[%s236 + $0x1c0] sm:$0xff] %v647
      %726 = vst [vmem:[%s236 + $0x1c8] sm:$0xff] %v649
      %727 = vst [vmem:[%s236 + $0x1d0] sm:$0xff] %v653
      %728 = vst [vmem:[%s236 + $0x1d8] sm:$0xff] %v655
      %729 = vst [vmem:[%s236 + $0x1e0] sm:$0xff] %v659
      %730 = vst [vmem:[%s236 + $0x1e8] sm:$0xff] %v661
      %731 = vst [vmem:[%s236 + $0x1f0] sm:$0xff] %v665
      %732 = vst [vmem:[%s236 + $0x1f8] sm:$0xff] %v667
      %s733 = smul.u32 32, %s19
      %s734 = smul.u32 2, %s20
      %p735 = scmp.lt.s32.totalorder %s18, 1
      %s736 = scalar_select %p735, %s18, 1
      %p737 = scmp.lt.s32.totalorder %s733, 31
      %s738 = scalar_select %p737, %s733, 31
      %p739 = scmp.lt.s32.totalorder %s734, 1
      %s740 = scalar_select %p739, %s734, 1
      %s741 = smul.addr %s738, 2
      %s742 = sadd.s32 %s740, %s741
      %s743 = smul.addr %s736, 64
      %s744 = sadd.s32 %s742, %s743
      %s745 = smul.addr %s744, 8
      %s746 = scalar_lea.vmem %s2, %s745
      // Predicated region
      $region29: #{correlation_volume.1} parent=27 // pred_check
        %p747 = pneg %p110
      $region30: #{correlation_volume.1} parent=27 // pred_check_branch
        %749 = sbr.rel (%p747) target = $region32
      $region31: #{correlation_volume.1} parent=27 // pred_region
        %s750 = smul.u32 32, %s19
        %s751 = smul.u32 2, %s20
      $region32: #{correlation_volume.1} parent=27 // pred_fallthru
        _
    $region28: #{correlation_volume.1} parent=5 // pred_fallthru
      _
    %p752 = scmp.le.s32.totalorder 2, %s8
    // Predicated region
    $region33: #{correlation_volume.1} parent=5 // pred_check
      %p753 = pneg %p752
    $region34: #{correlation_volume.1} parent=5 // pred_check_branch
      %755 = sbr.rel (%p753) target = $region36
    $region35: #{correlation_volume.1} parent=5 // pred_region
      %s756 = ssub.s32 %s8, 2
      // Predicated region
      $region37: #{correlation_volume.1} parent=35 // pred_check
        %p757 = pneg %p116
      $region38: #{correlation_volume.1} parent=35 // pred_check_branch
        %759 = sbr.rel (%p757) target = $region40
      $region39: #{correlation_volume.1} parent=35 // pred_region
        %s760 = smul.u32 32, %s22
        %s761 = smul.u32 2, %s23
        %p762 = scmp.lt.s32.totalorder %s21, 1
        %s763 = scalar_select %p762, %s21, 1
        %p764 = scmp.lt.s32.totalorder %s760, 31
        %s765 = scalar_select %p764, %s760, 31
        %p766 = scmp.lt.s32.totalorder %s761, 1
        %s767 = scalar_select %p766, %s761, 1
        %s768 = smul.addr %s765, 2
        %s769 = sadd.s32 %s767, %s768
        %s770 = smul.addr %s763, 64
        %s771 = sadd.s32 %s769, %s770
        %s772 = smul.addr %s771, 8
        %s773 = scalar_lea.vmem %s2, %s772
      $region40: #{correlation_volume.1} parent=35 // pred_fallthru
        _
    $region36: #{correlation_volume.1} parent=5 // pred_fallthru
      _
  $region6: #{correlation_volume.1} parent=0 // loop_footer
    %s12 = sadd.s32 1, %s8
  $region7: #{correlation_volume.1} parent=0 // loop_footer_branch
    %7 = sbr.rel target = $region3
  $region8: #{correlation_volume.1} parent=0 // loop_exit
    _

</llo_original>
